<compile_context>
chip_gen: v7x
topology: tpu7x:2x2x1
jax: 0.10.0
libtpu: 0.0.40
codegen_flags: <defaults>
</compile_context>

<pallas_src>
import functools

import jax
import jax.numpy as jnp
from jax import lax
from jax.experimental import pallas as pl
from jax.experimental.pallas import tpu as pltpu


def _selfsup_loss_kernel(thr_ref, fi_ref, fj_ref, tgti_ref, tgtj_ref, u_ref,
                         out_ref, *, margin, tile):
    i = pl.program_id(1)
    j = pl.program_id(2)

    # --- L2-normalize the two feature slabs (recomputed per tile, O(C*T)). ---
    fi = fi_ref[0]                                              # (T, C) f32
    fj = fj_ref[0]                                              # (T, C) f32
    inv_i = lax.rsqrt(jnp.maximum(jnp.sum(fi * fi, axis=1, keepdims=True), 1e-24))
    inv_j = lax.rsqrt(jnp.maximum(jnp.sum(fj * fj, axis=1, keepdims=True), 1e-24))
    fni = (fi * inv_i).astype(jnp.bfloat16)
    fnj = (fj * inv_j).astype(jnp.bfloat16)

    # --- pair_sim tile on the MXU: (T, C) x (T, C)^T -> (T, T) f32 acc. ---
    sim = lax.dot_general(fni, fnj, (((1,), (1,)), ((), ())),
                          preferred_element_type=jnp.float32)

    # --- pair_target via integer compare (replaces the one-hot matmul). ---
    same = tgti_ref[0] == tgtj_ref[0]                           # (T,1)==(1,T) -> (T,T)

    # --- fused loss + masks (two selects, no float mask products). ---
    loss = jnp.where(same, 1.0 - sim, jnp.maximum(sim - margin, 0.0))

    row = lax.broadcasted_iota(jnp.int32, sim.shape, 0) + i * tile
    col = lax.broadcasted_iota(jnp.int32, sim.shape, 1) + j * tile
    off_diag = row != col                                       # global 1 - eye(N)

    # sample_neg = (u / 2^15) > (1 - pos_fraction)  <=>  u_bits > threshold
    sample_neg = u_ref[0].astype(jnp.int32) > thr_ref[0, 0]
    keep = jnp.logical_and(jnp.logical_or(same, sample_neg), off_diag)
    masked = jnp.where(keep, loss, 0.0)

    # Per-column partial sums -> lane-dense (1, T) output block for this grid step.
    out_ref[0, 0] = jnp.sum(masked, axis=0, keepdims=True)


def _pick_tile(n, pref):
    if n <= pref:
        return n
    for t in range(pref, 127, -128):
        if n % t == 0:
            return t
    # TODO(synk): pad/mask edge tiles when N has no 128-multiple divisor <= pref.
    return n


def get_selfsup_loss(feat, target, u_bits, num_classes, margin=0.5, tile=512):
    """feat: (B, C, N) f32, target: (B, N) int, u_bits: (B, N, N) int16 in [0, 2^15)."""
    B, C, N = feat.shape
    T = _pick_tile(N, tile)
    nT = N // T

    # Layout plumbing (fused by XLA): (B, N, C) so the kernel contracts the last dim.
    feat_nc = jnp.transpose(feat, (0, 2, 1))
    tgt = target.astype(jnp.int32)
    tgt_i = tgt.reshape(B, N, 1)
    tgt_j = tgt.reshape(B, 1, N)

    # pos_fraction via per-class counts (no (B, N, K) one-hot materialized):
    # #(same-target pairs incl. diagonal) per batch = sum_k count_k^2.
    counts = jnp.zeros((B, num_classes), jnp.float32).at[
        jnp.arange(B)[:, None], tgt].add(1.0)
    pos_frac = jnp.sum(counts * counts) / float(B * N * N)
    thr = jnp.floor((1.0 - pos_frac) * 32768.0).astype(jnp.int32).reshape(1, 1)

    kernel = functools.partial(_selfsup_loss_kernel, margin=float(margin), tile=T)

    col_sums = pl.pallas_call(
        kernel,
        out_shape=jax.ShapeDtypeStruct((B, nT, 1, N), jnp.float32),
        grid=(B, nT, nT),
        in_specs=[
            pl.BlockSpec(memory_space=pltpu.MemorySpace.SMEM),      # thr (1,1) i32
            pl.BlockSpec((1, T, C), lambda b, i, j: (b, i, 0)),     # feat rows (i)
            pl.BlockSpec((1, T, C), lambda b, i, j: (b, j, 0)),     # feat cols (j)
            pl.BlockSpec((1, T, 1), lambda b, i, j: (b, i, 0)),     # target rows
            pl.BlockSpec((1, 1, T), lambda b, i, j: (b, 0, j)),     # target cols
            pl.BlockSpec((1, T, T), lambda b, i, j: (b, i, j)),     # uniform bits i16
        ],
        out_specs=pl.BlockSpec((1, 1, 1, T), lambda b, i, j: (b, i, 0, j)),
        compiler_params=pltpu.CompilerParams(
            dimension_semantics=("parallel", "parallel", "parallel"),
            vmem_limit_bytes=64 * 1024 * 1024),
    )(thr, feat_nc, feat_nc, tgt_i, tgt_j, u_bits)

    # total_loss = 0.5 * mean(masked cosine_loss)
    return 0.5 * jnp.sum(col_sums) / float(B * N * N)


def _reference(feat, target, u_bits, num_classes, margin=0.5):
    del num_classes
    B, C, N = feat.shape
    sq = jnp.sum(feat * feat, axis=1, keepdims=True)
    fn = (feat * lax.rsqrt(jnp.maximum(sq, 1e-24))).astype(jnp.bfloat16)
    pair_sim = jnp.einsum('bci,bcj->bij', fn, fn,
                          preferred_element_type=jnp.float32)
    same = target[:, :, None] == target[:, None, :]
    loss = jnp.where(same, 1.0 - pair_sim, jnp.maximum(pair_sim - margin, 0.0))
    pos_frac = jnp.mean(same.astype(jnp.float32))
    thr = jnp.floor((1.0 - pos_frac) * 32768.0).astype(jnp.int32)
    sample_neg = u_bits.astype(jnp.int32) > thr
    keep = (same | sample_neg) & ~jnp.eye(N, dtype=bool)[None]
    return 0.5 * jnp.mean(jnp.where(keep, loss, 0.0))


if __name__ == "__main__":
    def run_case(B, C, N, K, tile):
        key = jax.random.PRNGKey(0)
        k1, k2, k3 = jax.random.split(key, 3)
        feat = jax.random.normal(k1, (B, C, N), dtype=jnp.float32)
        target = jax.random.randint(k2, (B, N), 0, K)
        # 15-bit uniform sample bits (stands in for torch .uniform_() stream)
        u_bits = jax.random.randint(k3, (B, N, N), 0, 32768,
                                    dtype=jnp.int32).astype(jnp.int16)
        loss = jax.block_until_ready(
            get_selfsup_loss(feat, target, u_bits, num_classes=K,
                             margin=0.5, tile=tile))
        ref = jax.block_until_ready(
            _reference(feat, target, u_bits, num_classes=K, margin=0.5))
        assert jnp.allclose(loss, ref, atol=1e-5, rtol=1e-4), (loss, ref)

    run_case(B=2, C=4, N=16, K=4, tile=512)     # single-tile path
    run_case(B=2, C=8, N=256, K=5, tile=128)    # multi-tile path (2x2 tiles / batch)
    print("KERNEL_OK")
</pallas_src>

<mosaic_0001>
module attributes {stable_mosaic.version = 11 : i64} {
  func.func @_selfsup_loss_kernel(%arg0: i32, %arg1: i32, %arg2: i32, %arg3: memref<1x1xi32, #tpu.memory_space<smem>>, %arg4: memref<1x16x4xf32, #tpu.memory_space<vmem>>, %arg5: memref<1x16x4xf32, #tpu.memory_space<vmem>>, %arg6: memref<1x16x1xi32, #tpu.memory_space<vmem>>, %arg7: memref<1x1x16xi32, #tpu.memory_space<vmem>>, %arg8: memref<1x16x16xi16, #tpu.memory_space<vmem>>, %arg9: memref<1x1x1x16xf32, #tpu.memory_space<vmem>>) attributes {dimension_semantics = [#tpu.dimension_semantics<parallel>, #tpu.dimension_semantics<parallel>, #tpu.dimension_semantics<parallel>], iteration_bounds = array<i64: 2, 1, 1>, scalar_prefetch = 0 : i64, scratch_operands = 0 : i64, tpu.core_type = #tpu.core_type<tc>, window_params = [{transform_indices = @transform_0, window_bounds = array<i64: 1, 1>}, {transform_indices = @transform_1, window_bounds = array<i64: 1, 16, 4>}, {transform_indices = @transform_2, window_bounds = array<i64: 1, 16, 4>}, {transform_indices = @transform_3, window_bounds = array<i64: 1, 16, 1>}, {transform_indices = @transform_4, window_bounds = array<i64: 1, 1, 16>}, {transform_indices = @transform_5, window_bounds = array<i64: 1, 16, 16>}, {transform_indices = @transform_6, window_bounds = array<i64: 1, 1, 1, 16>}]} {
    %c0 = arith.constant 0 : index
    %c0_0 = arith.constant 0 : index
    %c0_1 = arith.constant 0 : index
    %0 = vector.load %arg4[%c0, %c0_0, %c0_1] : memref<1x16x4xf32, #tpu.memory_space<vmem>>, vector<1x16x4xf32>
    %1 = vector.shape_cast %0 : vector<1x16x4xf32> to vector<16x4xf32>
    %c0_2 = arith.constant 0 : index
    %c0_3 = arith.constant 0 : index
    %c0_4 = arith.constant 0 : index
    %2 = vector.load %arg5[%c0_2, %c0_3, %c0_4] : memref<1x16x4xf32, #tpu.memory_space<vmem>>, vector<1x16x4xf32>
    %3 = vector.shape_cast %2 : vector<1x16x4xf32> to vector<16x4xf32>
    %4 = arith.mulf %1, %1 : vector<16x4xf32>
    %cst = arith.constant dense<0.000000e+00> : vector<16xf32>
    %5 = vector.multi_reduction <add>, %4, %cst [1] : vector<16x4xf32> to vector<16xf32>
    %6 = vector.shape_cast %5 : vector<16xf32> to vector<16x1xf32>
    %cst_5 = arith.constant 1.000000e-24 : f32
    %7 = vector.broadcast %cst_5 : f32 to vector<16x1xf32>
    %8 = arith.maximumf %6, %7 : vector<16x1xf32>
    %9 = math.rsqrt %8 : vector<16x1xf32>
    %10 = arith.mulf %3, %3 : vector<16x4xf32>
    %cst_6 = arith.constant dense<0.000000e+00> : vector<16xf32>
    %11 = vector.multi_reduction <add>, %10, %cst_6 [1] : vector<16x4xf32> to vector<16xf32>
    %12 = vector.shape_cast %11 : vector<16xf32> to vector<16x1xf32>
    %cst_7 = arith.constant 1.000000e-24 : f32
    %13 = vector.broadcast %cst_7 : f32 to vector<16x1xf32>
    %14 = arith.maximumf %12, %13 : vector<16x1xf32>
    %15 = math.rsqrt %14 : vector<16x1xf32>
    %16 = vector.broadcast %9 : vector<16x1xf32> to vector<16x4xf32>
    %17 = arith.mulf %1, %16 : vector<16x4xf32>
    %18 = arith.truncf %17 : vector<16x4xf32> to vector<16x4xbf16>
    %19 = vector.broadcast %15 : vector<16x1xf32> to vector<16x4xf32>
    %20 = arith.mulf %3, %19 : vector<16x4xf32>
    %21 = arith.truncf %20 : vector<16x4xf32> to vector<16x4xbf16>
    %cst_8 = arith.constant dense<0.000000e+00> : vector<16x16xf32>
    %22 = tpu.matmul %18, %21, %cst_8 {dimension_numbers = #tpu.dot_dimension_numbers<[1], [1], [0], [0], [0, 0, 1, 0], [], []>} : vector<16x4xbf16>, vector<16x4xbf16>, vector<16x16xf32> -> vector<16x16xf32>
    %c0_9 = arith.constant 0 : index
    %c0_10 = arith.constant 0 : index
    %c0_11 = arith.constant 0 : index
    %23 = vector.load %arg6[%c0_9, %c0_10, %c0_11] : memref<1x16x1xi32, #tpu.memory_space<vmem>>, vector<1x16x1xi32>
    %24 = vector.shape_cast %23 : vector<1x16x1xi32> to vector<16x1xi32>
    %c0_12 = arith.constant 0 : index
    %c0_13 = arith.constant 0 : index
    %c0_14 = arith.constant 0 : index
    %25 = vector.load %arg7[%c0_12, %c0_13, %c0_14] : memref<1x1x16xi32, #tpu.memory_space<vmem>>, vector<1x1x16xi32>
    %26 = vector.shape_cast %25 : vector<1x1x16xi32> to vector<1x16xi32>
    %27 = vector.broadcast %24 : vector<16x1xi32> to vector<16x16xi32>
    %28 = vector.broadcast %26 : vector<1x16xi32> to vector<16x16xi32>
    %29 = arith.cmpi eq, %27, %28 : vector<16x16xi32>
    %cst_15 = arith.constant 1.000000e+00 : f32
    %30 = vector.broadcast %cst_15 : f32 to vector<16x16xf32>
    %31 = arith.subf %30, %22 : vector<16x16xf32>
    %cst_16 = arith.constant 5.000000e-01 : f32
    %32 = vector.broadcast %cst_16 : f32 to vector<16x16xf32>
    %33 = arith.subf %22, %32 : vector<16x16xf32>
    %cst_17 = arith.constant 0.000000e+00 : f32
    %34 = vector.broadcast %cst_17 : f32 to vector<16x16xf32>
    %35 = arith.maximumf %33, %34 : vector<16x16xf32>
    %36 = arith.select %29, %31, %35 : vector<16x16xi1>, vector<16x16xf32>
    %37 = tpu.iota {dimensions = array<i32: 0>} : vector<16x16xi32>
    %c16_i32 = arith.constant 16 : i32
    %38 = arith.muli %arg1, %c16_i32 : i32
    %39 = vector.broadcast %38 : i32 to vector<16x16xi32>
    %40 = arith.addi %37, %39 : vector<16x16xi32>
    %41 = tpu.iota {dimensions = array<i32: 1>} : vector<16x16xi32>
    %c16_i32_18 = arith.constant 16 : i32
    %42 = arith.muli %arg2, %c16_i32_18 : i32
    %43 = vector.broadcast %42 : i32 to vector<16x16xi32>
    %44 = arith.addi %41, %43 : vector<16x16xi32>
    %45 = arith.cmpi ne, %40, %44 : vector<16x16xi32>
    %c0_19 = arith.constant 0 : index
    %c0_20 = arith.constant 0 : index
    %c0_21 = arith.constant 0 : index
    %46 = vector.load %arg8[%c0_19, %c0_20, %c0_21] : memref<1x16x16xi16, #tpu.memory_space<vmem>>, vector<1x16x16xi16>
    %47 = vector.shape_cast %46 : vector<1x16x16xi16> to vector<16x16xi16>
    %48 = arith.extsi %47 : vector<16x16xi16> to vector<16x16xi32>
    %c0_22 = arith.constant 0 : index
    %c0_23 = arith.constant 0 : index
    %49 = memref.load %arg3[%c0_22, %c0_23] : memref<1x1xi32, #tpu.memory_space<smem>>
    %50 = vector.broadcast %49 : i32 to vector<16x16xi32>
    %51 = arith.cmpi sgt, %48, %50 : vector<16x16xi32>
    %52 = arith.ori %29, %51 : vector<16x16xi1>
    %53 = arith.andi %52, %45 : vector<16x16xi1>
    %cst_24 = arith.constant 0.000000e+00 : f32
    %54 = vector.broadcast %cst_24 : f32 to vector<16x16xf32>
    %55 = arith.select %53, %36, %54 : vector<16x16xi1>, vector<16x16xf32>
    %cst_25 = arith.constant dense<0.000000e+00> : vector<16xf32>
    %56 = vector.multi_reduction <add>, %55, %cst_25 [0] : vector<16x16xf32> to vector<16xf32>
    %57 = vector.shape_cast %56 : vector<16xf32> to vector<1x16xf32>
    %c0_26 = arith.constant 0 : index
    %c0_27 = arith.constant 0 : index
    %c0_28 = arith.constant 0 : index
    %c0_29 = arith.constant 0 : index
    %58 = vector.load %arg9[%c0_26, %c0_27, %c0_28, %c0_29] : memref<1x1x1x16xf32, #tpu.memory_space<vmem>>, vector<1x1x1x16xf32>
    %59 = vector.shape_cast %58 : vector<1x1x1x16xf32> to vector<1x16xf32>
    %60 = vector.shape_cast %57 : vector<1x16xf32> to vector<1x1x1x16xf32>
    tpu.vector_store %arg9[%c0_26, %c0_27, %c0_28, %c0_29], %60 {strides = array<i32>} : memref<1x1x1x16xf32, #tpu.memory_space<vmem>>, vector<1x1x1x16xf32>,
    return
  }
  func.func @transform_0(%arg0: i32, %arg1: i32, %arg2: i32) -> (i32, i32) {
    %c0_i32 = arith.constant 0 : i32
    %c0_i32_0 = arith.constant 0 : i32
    %c0_i32_1 = arith.constant 0 : i32
    return %c0_i32, %c0_i32_0 : i32, i32
  }
  func.func @transform_1(%arg0: i32, %arg1: i32, %arg2: i32) -> (i32, i32, i32) {
    %c0_i32 = arith.constant 0 : i32
    %c0_i32_0 = arith.constant 0 : i32
    return %arg0, %arg1, %c0_i32 : i32, i32, i32
  }
  func.func @transform_2(%arg0: i32, %arg1: i32, %arg2: i32) -> (i32, i32, i32) {
    %c0_i32 = arith.constant 0 : i32
    %c0_i32_0 = arith.constant 0 : i32
    return %arg0, %arg2, %c0_i32 : i32, i32, i32
  }
  func.func @transform_3(%arg0: i32, %arg1: i32, %arg2: i32) -> (i32, i32, i32) {
    %c0_i32 = arith.constant 0 : i32
    %c0_i32_0 = arith.constant 0 : i32
    return %arg0, %arg1, %c0_i32 : i32, i32, i32
  }
  func.func @transform_4(%arg0: i32, %arg1: i32, %arg2: i32) -> (i32, i32, i32) {
    %c0_i32 = arith.constant 0 : i32
    %c0_i32_0 = arith.constant 0 : i32
    return %arg0, %c0_i32, %arg2 : i32, i32, i32
  }
  func.func @transform_5(%arg0: i32, %arg1: i32, %arg2: i32) -> (i32, i32, i32) {
    %c0_i32 = arith.constant 0 : i32
    return %arg0, %arg1, %arg2 : i32, i32, i32
  }
  func.func @transform_6(%arg0: i32, %arg1: i32, %arg2: i32) -> (i32, i32, i32, i32) {
    %c0_i32 = arith.constant 0 : i32
    %c0_i32_0 = arith.constant 0 : i32
    return %arg0, %arg1, %c0_i32, %arg2 : i32, i32, i32, i32
  }
}

</mosaic_0001>

<llo_original>
// kernel: tpu_custom_call.1
$region0: #{tpu_custom_call.1}
  #allocation0 [shape = 'u32[]', space=smem, size = 0x4, offset = 0x4, fixed_abs, tag = 'smem constant byte address 0x4 - core index']
  #allocation1 [shape = 'u32[144,128]{1,0:T(1,128)}', space=vmem, size = 0x12000, scoped, tag = 'internal scratch']
  #allocation2 [shape = 's32[1,1]{1,0:T(1,128)S(6)}', space=smem, size = 0x200, scoped, tag = 'scoped memory for tpu_custom_call.1']
  %s0 = inlined_call_operand.<no memory space> [shape: s32[1,1], index: 0, kind: input, shape index: {}]
  %s1 = inlined_call_operand.hbm [shape: f32[2,16,4], index: 1, kind: input, shape index: {}]
  %s2 = inlined_call_operand.hbm [shape: f32[2,16,4], index: 2, kind: input, shape index: {}]
  %s3 = inlined_call_operand.hbm [shape: s32[2,16,1], index: 3, kind: input, shape index: {}]
  %s4 = inlined_call_operand.hbm [shape: s32[2,1,16], index: 4, kind: input, shape index: {}]
  %s5 = inlined_call_operand.hbm [shape: s16[2,16,16], index: 5, kind: input, shape index: {}]
  %s6 = inlined_call_operand.hbm [shape: f32[2,1,1,16], index: 6, kind: output, shape index: {}]
  %s7 = sld [smem:[#allocation0]]
  $region77: #{tpu_custom_call.1} parent=0
    _
  %s9 = ssub.s32 1, %s7
  %s10 = scalar_select 0, %s9, %s7
  %11 = sst [smem:[#allocation2]] %s0
  $region1: #{tpu_custom_call.1} parent=0
    #allocation3 [shape = 'u8[16384]{0}', space=vmem, size = 0x4000, scoped, tag = 'input window, operand 1']
    #allocation4 [shape = 's32[2]{0}', space=sflag, size = 0x8, scoped, tag = 'scoped memory for tpu_custom_call.1']
    #allocation5 [shape = 's32[2]{0}', space=sflag, size = 0x8, scoped, tag = 'scoped memory for tpu_custom_call.1']
    #allocation6 [shape = 'u8[16384]{0}', space=vmem, size = 0x4000, scoped, tag = 'input window, operand 2']
    #allocation7 [shape = 's32[2]{0}', space=sflag, size = 0x8, scoped, tag = 'scoped memory for tpu_custom_call.1']
    #allocation8 [shape = 'u8[16384]{0}', space=vmem, size = 0x4000, scoped, tag = 'input window, operand 3']
    #allocation9 [shape = 'u8[1024]{0}', space=vmem, size = 0x400, scoped, tag = 'input window, operand 4']
    #allocation10 [shape = 's32[2]{0}', space=sflag, size = 0x8, scoped, tag = 'scoped memory for tpu_custom_call.1']
    #allocation11 [shape = 'u8[8192]{0}', space=vmem, size = 0x2000, scoped, tag = 'input window, operand 5']
    #allocation12 [shape = 'u8[1024]{0}', space=vmem, size = 0x400, scoped, tag = 'output window, operand 0']
    %12 = vsyncpa [#allocation4], 0
    %s13 = scalar_lea.sflag [#allocation4], 1
    %14 = vsyncpa %s13, 0
    %15 = vsyncpa [#allocation7], 0
    %s16 = scalar_lea.sflag [#allocation7], 1
    %17 = vsyncpa %s16, 0
    %18 = vsyncpa [#allocation10], 0
    %s19 = scalar_lea.sflag [#allocation10], 1
    %20 = vsyncpa %s19, 0
    %21 = vsyncpa [#allocation5], 0
    %s22 = scalar_lea.sflag [#allocation5], 1
    %23 = vsyncpa %s22, 0
    loop: start=0, step=1, limit=4
    $region2: #{tpu_custom_call.1} parent=1 // loop_pre_header
      _
    $region3: #{tpu_custom_call.1} parent=1 // loop_header
      %s25 = sphi 0, %s29
      %p26 = scmp.ge.s32.totalorder %s25, 4
      %s32 = sphi 0, %s51
      %s33 = sphi 0, %s47
      %s34 = sphi 0, %s43
      %s35 = sphi 0, %s32
      %s36 = sphi 0, %s33
      %s37 = sphi 0, %s34
      %s38 = sphi 0, %s35
      %s39 = sphi 0, %s36
      %s40 = sphi 0, %s37
      %s52 = sphi 0, %s52
      %s54 = sphi 0, %s52
      %s55 = sphi 0, %s54
      %s69 = sphi 0, %s55
      %s77 = sphi 0, %s79
      %s80 = sphi 0, %s77
      %s81 = sphi 0, %s80
      %s97 = sphi 0, %s81
      %s105 = sphi 0, %s107
      %s108 = sphi 0, %s105
      %s109 = sphi 0, %s108
      %s125 = sphi 0, %s109
      %s133 = sphi 0, %s135
      %s136 = sphi 0, %s133
      %s137 = sphi 0, %s136
      %s153 = sphi 0, %s137
      %s161 = sphi 0, %s163
      %s164 = sphi 0, %s161
      %s165 = sphi 0, %s164
      %s181 = sphi 0, %s165
      %s191 = sphi 0, %s193
      %s194 = sphi 0, %s191
      %s195 = sphi 0, %s194
      %s211 = sphi 0, %s195
      %s221 = sphi 0, %s223
      %s224 = sphi 0, %s221
      %s225 = sphi 0, %s224
      %s241 = sphi 0, %s225
    $region4: #{tpu_custom_call.1} parent=1 // loop_header_branch
      %28 = sbr.rel (%p26) target = $region8
    $region5: #{tpu_custom_call.1} parent=1 // loop_body
      %s30 = ssub.s32 %s25, 1
      %s31 = ssub.s32 %s25, 2
      %s41 = sadd.s32 1, %s34
      %p42 = scmp.ge.s32.totalorder %s41, 1
      %s43 = scalar_select %p42, 0, %s41
      %s44 = sadd.s32 1, %s33
      %s45 = scalar_select %p42, %s44, %s33
      %p46 = scmp.ge.s32.totalorder %s45, 1
      %s47 = scalar_select %p46, 0, %s45
      %s48 = sadd.s32 1, %s32
      %s49 = scalar_select %p46, %s48, %s32
      %p50 = scmp.ge.s32.totalorder %s49, 2
      %s51 = scalar_select %p50, 0, %s49
      %s53 = sadd.s32 %s52, 1
      %p56 = scmp.eq.s32.totalorder %s25, 1
      %p57 = scmp.ne.s32.totalorder %s52, %s54
      %p58 = scmp.eq.s32.totalorder %s25, 0
      %p59 = por %p57, %p58
      %p60 = scmp.ne.s32.totalorder %s52, %s54
      %p61 = scmp.eq.s32.totalorder %s30, 1
      %p62 = por %p60, %p61
      %p63 = scmp.ne.s32.totalorder %s54, %s55
      %p64 = scmp.eq.s32.totalorder %s30, 0
      %p65 = por %p63, %p64
      %p66 = scmp.ne.s32.totalorder %s54, %s55
      %p67 = scmp.eq.s32.totalorder %s31, 1
      %p68 = por %p66, %p67
      %p70 = scmp.ne.s32.totalorder %s55, %s69
      %p71 = scmp.eq.s32.totalorder %s31, 0
      %p72 = por %p70, %p71
      %s73 = ssub.s32 %s32, %s51
      %s74 = ssub.s32 %s33, %s47
      %s75 = sor.u32 %s73, %s74
      %p76 = scmp.eq.s32.totalorder %s75, 0
      %s78 = sadd.s32 %s77, 1
      %s79 = scalar_select %p76, %s77, %s78
      %p82 = pneg %p76
      %p83 = scmp.eq.s32.totalorder %s25, 1
      %p84 = por %p82, %p83
      %p85 = scmp.ne.s32.totalorder %s77, %s80
      %p86 = scmp.eq.s32.totalorder %s25, 0
      %p87 = por %p85, %p86
      %p88 = scmp.ne.s32.totalorder %s77, %s80
      %p89 = scmp.eq.s32.totalorder %s30, 1
      %p90 = por %p88, %p89
      %p91 = scmp.ne.s32.totalorder %s80, %s81
      %p92 = scmp.eq.s32.totalorder %s30, 0
      %p93 = por %p91, %p92
      %p94 = scmp.ne.s32.totalorder %s80, %s81
      %p95 = scmp.eq.s32.totalorder %s31, 1
      %p96 = por %p94, %p95
      %p98 = scmp.ne.s32.totalorder %s81, %s97
      %p99 = scmp.eq.s32.totalorder %s31, 0
      %p100 = por %p98, %p99
      %s101 = ssub.s32 %s32, %s51
      %s102 = ssub.s32 %s34, %s43
      %s103 = sor.u32 %s101, %s102
      %p104 = scmp.eq.s32.totalorder %s103, 0
      %s106 = sadd.s32 %s105, 1
      %s107 = scalar_select %p104, %s105, %s106
      %p110 = pneg %p104
      %p111 = scmp.eq.s32.totalorder %s25, 1
      %p112 = por %p110, %p111
      %p113 = scmp.ne.s32.totalorder %s105, %s108
      %p114 = scmp.eq.s32.totalorder %s25, 0
      %p115 = por %p113, %p114
      %p116 = scmp.ne.s32.totalorder %s105, %s108
      %p117 = scmp.eq.s32.totalorder %s30, 1
      %p118 = por %p116, %p117
      %p119 = scmp.ne.s32.totalorder %s108, %s109
      %p120 = scmp.eq.s32.totalorder %s30, 0
      %p121 = por %p119, %p120
      %p122 = scmp.ne.s32.totalorder %s108, %s109
      %p123 = scmp.eq.s32.totalorder %s31, 1
      %p124 = por %p122, %p123
      %p126 = scmp.ne.s32.totalorder %s109, %s125
      %p127 = scmp.eq.s32.totalorder %s31, 0
      %p128 = por %p126, %p127
      %s129 = ssub.s32 %s32, %s51
      %s130 = ssub.s32 %s33, %s47
      %s131 = sor.u32 %s129, %s130
      %p132 = scmp.eq.s32.totalorder %s131, 0
      %s134 = sadd.s32 %s133, 1
      %s135 = scalar_select %p132, %s133, %s134
      %p138 = pneg %p132
      %p139 = scmp.eq.s32.totalorder %s25, 1
      %p140 = por %p138, %p139
      %p141 = scmp.ne.s32.totalorder %s133, %s136
      %p142 = scmp.eq.s32.totalorder %s25, 0
      %p143 = por %p141, %p142
      %p144 = scmp.ne.s32.totalorder %s133, %s136
      %p145 = scmp.eq.s32.totalorder %s30, 1
      %p146 = por %p144, %p145
      %p147 = scmp.ne.s32.totalorder %s136, %s137
      %p148 = scmp.eq.s32.totalorder %s30, 0
      %p149 = por %p147, %p148
      %p150 = scmp.ne.s32.totalorder %s136, %s137
      %p151 = scmp.eq.s32.totalorder %s31, 1
      %p152 = por %p150, %p151
      %p154 = scmp.ne.s32.totalorder %s137, %s153
      %p155 = scmp.eq.s32.totalorder %s31, 0
      %p156 = por %p154, %p155
      %s157 = ssub.s32 %s32, %s51
      %s158 = ssub.s32 %s34, %s43
      %s159 = sor.u32 %s157, %s158
      %p160 = scmp.eq.s32.totalorder %s159, 0
      %s162 = sadd.s32 %s161, 1
      %s163 = scalar_select %p160, %s161, %s162
      %p166 = pneg %p160
      %p167 = scmp.eq.s32.totalorder %s25, 1
      %p168 = por %p166, %p167
      %p169 = scmp.ne.s32.totalorder %s161, %s164
      %p170 = scmp.eq.s32.totalorder %s25, 0
      %p171 = por %p169, %p170
      %p172 = scmp.ne.s32.totalorder %s161, %s164
      %p173 = scmp.eq.s32.totalorder %s30, 1
      %p174 = por %p172, %p173
      %p175 = scmp.ne.s32.totalorder %s164, %s165
      %p176 = scmp.eq.s32.totalorder %s30, 0
      %p177 = por %p175, %p176
      %p178 = scmp.ne.s32.totalorder %s164, %s165
      %p179 = scmp.eq.s32.totalorder %s31, 1
      %p180 = por %p178, %p179
      %p182 = scmp.ne.s32.totalorder %s165, %s181
      %p183 = scmp.eq.s32.totalorder %s31, 0
      %p184 = por %p182, %p183
      %s185 = ssub.s32 %s32, %s51
      %s186 = ssub.s32 %s33, %s47
      %s187 = sor.u32 %s185, %s186
      %s188 = ssub.s32 %s34, %s43
      %s189 = sor.u32 %s187, %s188
      %p190 = scmp.eq.s32.totalorder %s189, 0
      %s192 = sadd.s32 %s191, 1
      %s193 = scalar_select %p190, %s191, %s192
      %p196 = pneg %p190
      %p197 = scmp.eq.s32.totalorder %s25, 1
      %p198 = por %p196, %p197
      %p199 = scmp.ne.s32.totalorder %s191, %s194
      %p200 = scmp.eq.s32.totalorder %s25, 0
      %p201 = por %p199, %p200
      %p202 = scmp.ne.s32.totalorder %s191, %s194
      %p203 = scmp.eq.s32.totalorder %s30, 1
      %p204 = por %p202, %p203
      %p205 = scmp.ne.s32.totalorder %s194, %s195
      %p206 = scmp.eq.s32.totalorder %s30, 0
      %p207 = por %p205, %p206
      %p208 = scmp.ne.s32.totalorder %s194, %s195
      %p209 = scmp.eq.s32.totalorder %s31, 1
      %p210 = por %p208, %p209
      %p212 = scmp.ne.s32.totalorder %s195, %s211
      %p213 = scmp.eq.s32.totalorder %s31, 0
      %p214 = por %p212, %p213
      %s215 = ssub.s32 %s32, %s51
      %s216 = ssub.s32 %s33, %s47
      %s217 = sor.u32 %s215, %s216
      %s218 = ssub.s32 %s34, %s43
      %s219 = sor.u32 %s217, %s218
      %p220 = scmp.eq.s32.totalorder %s219, 0
      %s222 = sadd.s32 %s221, 1
      %s223 = scalar_select %p220, %s221, %s222
      %p226 = pneg %p220
      %p227 = scmp.eq.s32.totalorder %s25, 1
      %p228 = por %p226, %p227
      %p229 = scmp.ne.s32.totalorder %s221, %s224
      %p230 = scmp.eq.s32.totalorder %s25, 0
      %p231 = por %p229, %p230
      %p232 = scmp.ne.s32.totalorder %s221, %s224
      %p233 = scmp.eq.s32.totalorder %s30, 1
      %p234 = por %p232, %p233
      %p235 = scmp.ne.s32.totalorder %s224, %s225
      %p236 = scmp.eq.s32.totalorder %s30, 0
      %p237 = por %p235, %p236
      %p238 = scmp.ne.s32.totalorder %s224, %s225
      %p239 = scmp.eq.s32.totalorder %s31, 1
      %p240 = por %p238, %p239
      %p242 = scmp.ne.s32.totalorder %s225, %s241
      %p243 = scmp.eq.s32.totalorder %s31, 0
      %p244 = por %p242, %p243
      %p245 = scmp.le.s32.totalorder 1, %s25
      %p246 = scmp.lt.s32.totalorder %s25, 3
      %p247 = pnand %p245, %p246
      %p248 = pneg %p247
      // Predicated region
      $region9: #{tpu_custom_call.1} parent=5 // pred_check
        _
      $region10: #{tpu_custom_call.1} parent=5 // pred_check_branch
        %250 = sbr.rel (%p247) target = $region12
      $region11: #{tpu_custom_call.1} parent=5 // pred_region
        %s251 = ssub.s32 %s25, 1
        // Predicated region
        $region13: #{tpu_custom_call.1} parent=11 // pred_check
          %p252 = pneg %p65
        $region14: #{tpu_custom_call.1} parent=11 // pred_check_branch
          %254 = sbr.rel (%p252) target = $region16
        $region15: #{tpu_custom_call.1} parent=11 // pred_region
          _
        $region16: #{tpu_custom_call.1} parent=11 // pred_fallthru
          _
      $region12: #{tpu_custom_call.1} parent=5 // pred_fallthru
        _
      %p255 = scmp.lt.s32.totalorder %s25, 2
      // Predicated region
      $region17: #{tpu_custom_call.1} parent=5 // pred_check
        %p256 = pneg %p255
      $region18: #{tpu_custom_call.1} parent=5 // pred_check_branch
        %258 = sbr.rel (%p256) target = $region20
      $region19: #{tpu_custom_call.1} parent=5 // pred_region
        // Predicated region
        $region21: #{tpu_custom_call.1} parent=19 // pred_check
          %p259 = pneg %p87
        $region22: #{tpu_custom_call.1} parent=19 // pred_check_branch
          %261 = sbr.rel (%p259) target = $region24
        $region23: #{tpu_custom_call.1} parent=19 // pred_region
          %s262 = sand.u32 %s77, 1
          %s263 = scalar_lea.sflag [#allocation4], %s262
          %s264 = sand.u32 %s77, 1
          %s265 = smul.addr %s264, 16
          %s266 = scalar_lea.vmem [#allocation3], %s265
          %s267 = smul.u32 2, %s33
          %s269 = ssub.s32 256, 256
          %270 = vsyncadd %s263, %s269
          %s271 = smul.addr %s32, 2
          %s272 = sadd.s32 %s267, %s271
          %s273 = smul.addr %s272, 128
          %s274 = scalar_lea.hbm %s1, %s273
          %s275 = sshll.u32 %s266, 4
          %s276 = int_to_ptr.vmem [resolvable:$true] %s275
          %281 = dma.hbm_to_vmem [thread:$0]  %s274, 256, %s276, %s263, 128, 128, 8
        $region24: #{tpu_custom_call.1} parent=19 // pred_fallthru
          _
        // Predicated region
        $region25: #{tpu_custom_call.1} parent=19 // pred_check
          %p282 = pneg %p115
        $region26: #{tpu_custom_call.1} parent=19 // pred_check_branch
          %284 = sbr.rel (%p282) target = $region28
        $region27: #{tpu_custom_call.1} parent=19 // pred_region
          %s285 = sand.u32 %s25, 1
          %s286 = scalar_lea.sflag [#allocation7], %s285
          %s287 = sand.u32 %s105, 1
          %s288 = smul.addr %s287, 16
          %s289 = scalar_lea.vmem [#allocation6], %s288
          %s290 = smul.u32 2, %s34
          %s292 = ssub.s32 256, 256
          %293 = vsyncadd %s286, %s292
          %s294 = smul.addr %s32, 2
          %s295 = sadd.s32 %s290, %s294
          %s296 = smul.addr %s295, 128
          %s297 = scalar_lea.hbm %s2, %s296
          %s298 = sshll.u32 %s289, 4
          %s299 = int_to_ptr.vmem [resolvable:$true] %s298
          %304 = dma.hbm_to_vmem [thread:$0]  %s297, 256, %s299, %s286, 128, 128, 8
        $region28: #{tpu_custom_call.1} parent=19 // pred_fallthru
          _
        // Predicated region
        $region29: #{tpu_custom_call.1} parent=19 // pred_check
          %p305 = pneg %p143
        $region30: #{tpu_custom_call.1} parent=19 // pred_check_branch
          %307 = sbr.rel (%p305) target = $region32
        $region31: #{tpu_custom_call.1} parent=19 // pred_region
          %s308 = sand.u32 %s25, 1
          %s309 = scalar_lea.sflag [#allocation7], %s308
          %s310 = sand.u32 %s133, 1
          %s311 = smul.addr %s310, 16
          %s312 = scalar_lea.vmem [#allocation8], %s311
          %s313 = smul.u32 2, %s33
          %s315 = ssub.s32 256, 256
          %316 = vsyncadd %s309, %s315
          %s317 = smul.addr %s32, 2
          %s318 = sadd.s32 %s313, %s317
          %s319 = smul.addr %s318, 128
          %s320 = scalar_lea.hbm %s3, %s319
          %s321 = sshll.u32 %s312, 4
          %s322 = int_to_ptr.vmem [resolvable:$true] %s321
          %327 = dma.hbm_to_vmem [thread:$0]  %s320, 256, %s322, %s309, 128, 128, 8
        $region32: #{tpu_custom_call.1} parent=19 // pred_fallthru
          _
        // Predicated region
        $region33: #{tpu_custom_call.1} parent=19 // pred_check
          %p328 = pneg %p171
        $region34: #{tpu_custom_call.1} parent=19 // pred_check_branch
          %330 = sbr.rel (%p328) target = $region36
        $region35: #{tpu_custom_call.1} parent=19 // pred_region
          %s331 = sand.u32 %s25, 1
          %s332 = scalar_lea.sflag [#allocation10], %s331
          %s333 = sand.u32 %s161, 1
          %s334 = scalar_lea.vmem [#allocation9], %s333
          %s336 = ssub.s32 16, 16
          %337 = vsyncadd %s332, %s336
          %s338 = sadd.s32 %s34, %s32
          %s339 = smul.addr %s338, 16
          %s340 = scalar_lea.hbm %s4, %s339
          %s342 = sshll.u32 %s334, 4
          %s343 = int_to_ptr.vmem [resolvable:$true] %s342
          %345 = dma.hbm_to_vmem [thread:$0]  %s340, 16, %s343, %s332
        $region36: #{tpu_custom_call.1} parent=19 // pred_fallthru
          _
        // Predicated region
        $region37: #{tpu_custom_call.1} parent=19 // pred_check
          %p346 = pneg %p201
        $region38: #{tpu_custom_call.1} parent=19 // pred_check_branch
          %348 = sbr.rel (%p346) target = $region40
        $region39: #{tpu_custom_call.1} parent=19 // pred_region
          %s349 = sand.u32 %s25, 1
          %s350 = scalar_lea.sflag [#allocation10], %s349
          %s351 = sand.u32 %s191, 1
          %s352 = smul.addr %s351, 8
          %s353 = scalar_lea.vmem [#allocation11], %s352
          %s354 = smul.u32 2, %s33
          %s356 = ssub.s32 128, 128
          %357 = vsyncadd %s350, %s356
          %s358 = sadd.s32 %s34, %s354
          %s359 = smul.addr %s32, 2
          %s360 = sadd.s32 %s358, %s359
          %s361 = smul.addr %s360, 64
          %s362 = scalar_lea.hbm %s5, %s361
          %s363 = sshll.u32 %s353, 4
          %s364 = int_to_ptr.vmem [resolvable:$true] %s363
          %369 = dma.hbm_to_vmem [thread:$0]  %s362, 128, %s364, %s350, 64, 64, 4
        $region40: #{tpu_custom_call.1} parent=19 // pred_fallthru
          _
      $region20: #{tpu_custom_call.1} parent=5 // pred_fallthru
        _
      %p370 = scmp.le.s32.totalorder 1, %s25
      %p371 = scmp.lt.s32.totalorder %s25, 3
      %p372 = pnand %p370, %p371
      %p373 = pneg %p372
      // Predicated region
      $region41: #{tpu_custom_call.1} parent=5 // pred_check
        _
      $region42: #{tpu_custom_call.1} parent=5 // pred_check_branch
        %375 = sbr.rel (%p372) target = $region44
      $region43: #{tpu_custom_call.1} parent=5 // pred_region
        %s376 = ssub.s32 %s25, 1
        %s377 = sand.u32 %s80, 1
        %s378 = scalar_lea.sflag [#allocation4], %s377
        %s379 = sand.u32 %s80, 1
        %s380 = smul.addr %s379, 16
        %s381 = scalar_lea.vmem [#allocation3], %s380
        // Predicated region
        $region45: #{tpu_custom_call.1} parent=43 // pred_check
          %p382 = pneg %p93
        $region46: #{tpu_custom_call.1} parent=43 // pred_check_branch
          %384 = sbr.rel (%p382) target = $region48
        $region47: #{tpu_custom_call.1} parent=43 // pred_region
          %385 = dma.done %s378, 256
        $region48: #{tpu_custom_call.1} parent=43 // pred_fallthru
          _
        %s386 = sand.u32 %s30, 1
        %s387 = scalar_lea.sflag [#allocation7], %s386
        %s388 = sand.u32 %s108, 1
        %s389 = smul.addr %s388, 16
        %s390 = scalar_lea.vmem [#allocation6], %s389
        // Predicated region
        $region49: #{tpu_custom_call.1} parent=43 // pred_check
          %p391 = pneg %p121
        $region50: #{tpu_custom_call.1} parent=43 // pred_check_branch
          %393 = sbr.rel (%p391) target = $region52
        $region51: #{tpu_custom_call.1} parent=43 // pred_region
          %394 = dma.done %s387, 256
        $region52: #{tpu_custom_call.1} parent=43 // pred_fallthru
          _
        %s395 = sand.u32 %s30, 1
        %s396 = scalar_lea.sflag [#allocation7], %s395
        %s397 = sand.u32 %s136, 1
        %s398 = smul.addr %s397, 16
        %s399 = scalar_lea.vmem [#allocation8], %s398
        // Predicated region
        $region53: #{tpu_custom_call.1} parent=43 // pred_check
          %p400 = pneg %p149
        $region54: #{tpu_custom_call.1} parent=43 // pred_check_branch
          %402 = sbr.rel (%p400) target = $region56
        $region55: #{tpu_custom_call.1} parent=43 // pred_region
          %403 = dma.done %s396, 256
        $region56: #{tpu_custom_call.1} parent=43 // pred_fallthru
          _
        %s404 = sand.u32 %s30, 1
        %s405 = scalar_lea.sflag [#allocation10], %s404
        %s406 = sand.u32 %s164, 1
        %s407 = scalar_lea.vmem [#allocation9], %s406
        // Predicated region
        $region57: #{tpu_custom_call.1} parent=43 // pred_check
          %p408 = pneg %p177
        $region58: #{tpu_custom_call.1} parent=43 // pred_check_branch
          %410 = sbr.rel (%p408) target = $region60
        $region59: #{tpu_custom_call.1} parent=43 // pred_region
          %411 = dma.done %s405, 16
        $region60: #{tpu_custom_call.1} parent=43 // pred_fallthru
          _
        %s412 = sand.u32 %s30, 1
        %s413 = scalar_lea.sflag [#allocation10], %s412
        %s414 = sand.u32 %s194, 1
        %s415 = smul.addr %s414, 8
        %s416 = scalar_lea.vmem [#allocation11], %s415
        // Predicated region
        $region61: #{tpu_custom_call.1} parent=43 // pred_check
          %p417 = pneg %p207
        $region62: #{tpu_custom_call.1} parent=43 // pred_check_branch
          %419 = sbr.rel (%p417) target = $region64
        $region63: #{tpu_custom_call.1} parent=43 // pred_region
          %420 = dma.done %s413, 128
        $region64: #{tpu_custom_call.1} parent=43 // pred_fallthru
          _
        %p421 = pneg %p65
        %p422 = pneg %p62
        %s423 = sand.u32 %s80, 1
        %s424 = scalar_lea.sflag [#allocation4], %s423
        %s425 = sand.u32 %s80, 1
        %s426 = smul.addr %s425, 16
        %s427 = scalar_lea.vmem [#allocation3], %s426
        %p428 = pneg %p93
        %p429 = pneg %p90
        %s430 = sand.u32 %s30, 1
        %s431 = scalar_lea.sflag [#allocation7], %s430
        %s432 = sand.u32 %s108, 1
        %s433 = smul.addr %s432, 16
        %s434 = scalar_lea.vmem [#allocation6], %s433
        %p435 = pneg %p121
        %p436 = pneg %p118
        %s437 = sand.u32 %s30, 1
        %s438 = scalar_lea.sflag [#allocation7], %s437
        %s439 = sand.u32 %s136, 1
        %s440 = smul.addr %s439, 16
        %s441 = scalar_lea.vmem [#allocation8], %s440
        %p442 = pneg %p149
        %p443 = pneg %p146
        %s444 = sand.u32 %s30, 1
        %s445 = scalar_lea.sflag [#allocation10], %s444
        %s446 = sand.u32 %s164, 1
        %s447 = scalar_lea.vmem [#allocation9], %s446
        %p448 = pneg %p177
        %p449 = pneg %p174
        %s450 = sand.u32 %s30, 1
        %s451 = scalar_lea.sflag [#allocation10], %s450
        %s452 = sand.u32 %s194, 1
        %s453 = smul.addr %s452, 8
        %s454 = scalar_lea.vmem [#allocation11], %s453
        %p455 = pneg %p207
        %p456 = pneg %p204
        %p457 = pneg %p237
        %p458 = pneg %p234
        %s459 = sand.u32 %s224, 1
        %s460 = scalar_lea.sflag [#allocation5], %s459
        %s461 = sand.u32 %s224, 1
        %s462 = scalar_lea.vmem [#allocation12], %s461
        %s463 = smul.u32 2, %s36
        %s464 = smul.u32 2, %s37
        %s465 = smul.u32 2, %s36
        %s466 = smul.u32 2, %s36
        %v468 = vld [vmem:[%s381] sm:$0xff]
        %v469 = vld [vmem:[%s381 + $0x8] sm:$0xff]
        %v470 = vld [vmem:[%s390] sm:$0xff]
        %v471 = vld [vmem:[%s390 + $0x8] sm:$0xff]
        %v472 = vmul.f32 %v468, %v468
        %v473 = vmul.f32 %v469, %v469
        %vm474 = vcmask 31744
        %v475 = vsel %vm474, %v472, 0.0
        %476 = vadd.xlane.f32.xlu0 %v475
        %v477 = vpop.xlane.xlu0 %476
        %v478 = vsel %vm474, %v473, 0.0
        %479 = vadd.xlane.f32.xlu0 %v478
        %v480 = vpop.xlane.xlu0 %479
        %v481 = vmax.f32 %v477, 1e-24
        %v482 = vmax.f32 %v480, 1e-24
        %v483 = vrsqrt.pop %v481
        %v484 = vrsqrt.pop %v482
        %v485 = vmul.f32 %v470, %v470
        %v486 = vmul.f32 %v471, %v471
        %v487 = vsel %vm474, %v485, 0.0
        %488 = vadd.xlane.f32.xlu0 %v487
        %v489 = vpop.xlane.xlu0 %488
        %v490 = vsel %vm474, %v486, 0.0
        %491 = vadd.xlane.f32.xlu0 %v490
        %v492 = vpop.xlane.xlu0 %491
        %v493 = vmax.f32 %v489, 1e-24
        %v494 = vmax.f32 %v492, 1e-24
        %v495 = vrsqrt.pop %v493
        %v496 = vrsqrt.pop %v494
        %v497 = vmul.f32 %v468, %v483
        %v498 = vmul.f32 %v469, %v484
        %v499 = vpack.c.bf16 %v498, %v497
        %v500 = vmul.f32 %v470, %v495
        %v501 = vmul.f32 %v471, %v496
        %v502 = vpack.c.bf16 %v501, %v500
        %v504 = vsel %vm474, %v499, 0
        %v507 = vsel %vm474, %v502, 0
        %509 = vmatprep.subr.bf16.mxu0 0
        %510 = vmatpush1.bf16.xpose.msra.mxu0 %v507
        %511 = vmatprep.subr.bf16.mxu0 0
        %512 = vmatpush1.bf16.xpose.msra.mxu0 0
        %513 = vmatprep.subr.bf16.mxu0 0
        %514 = vmatpush1.bf16.xpose.msra.mxu0 0
        %515 = vmatprep.subr.bf16.mxu0 0
        %516 = vmatpush1.bf16.xpose.msra.mxu0 0
        %517 = vmatprep.subr.bf16.mxu0 0
        %518 = vmatpush1.bf16.xpose.msra.mxu0 0
        %519 = vmatprep.subr.bf16.mxu0 0
        %520 = vmatpush1.bf16.xpose.msra.mxu0 0
        %521 = vmatprep.subr.bf16.mxu0 0
        %522 = vmatpush1.bf16.xpose.msra.mxu0 0
        %523 = vmatprep.subr.bf16.mxu0 0
        %524 = vmatpush1.bf16.xpose.msra.mxu0 0
        %525 = vmatprep.subr.bf16.mxu0 0
        %526 = vmatpush1.bf16.xpose.msra.mxu0 0
        %527 = vmatprep.subr.bf16.mxu0 0
        %528 = vmatpush1.bf16.xpose.msra.mxu0 0
        %529 = vmatprep.subr.bf16.mxu0 0
        %530 = vmatpush1.bf16.xpose.msra.mxu0 0
        %531 = vmatprep.subr.bf16.mxu0 0
        %532 = vmatpush1.bf16.xpose.msra.mxu0 0
        %533 = vmatprep.subr.bf16.mxu0 0
        %534 = vmatpush1.bf16.xpose.msra.mxu0 0
        %535 = vmatprep.subr.bf16.mxu0 0
        %536 = vmatpush1.bf16.xpose.msra.mxu0 0
        %537 = vmatprep.subr.bf16.mxu0 0
        %538 = vmatpush1.bf16.xpose.msra.mxu0 0
        %539 = vmatprep.subr.bf16.mxu0 0
        %540 = vmatpush1.bf16.xpose.msra.mxu0 0
        %541 = vmatprep.mubr.bf16.mxu0 0
        %542 = vmatmul.mubr.bf16.gmra.mrb[0].mxu0 %v504
        %v543 = vpop.f32.mrb[0].mxu0
        %v544 = vadd.f32 0.0, %v543
        %v545 = vpop.f32.mrb[0].mxu0
        %v546 = vpop.f32.mrb[0].mxu0
        %v547 = vadd.f32 0.0, %v546
        %v548 = vpop.f32.mrb[0].mxu0
        %549 = vdwg.mxu0
        %v550 = vld [vmem:[%s399] sm:$0xff]
        %v551 = vld [vmem:[%s399 + $0x8] sm:$0xff]
        %v552 = vld [vmem:[%s407] sm:$0x1]
        %553 = vset.pattern.permute.xlu0 0
        %554 = vperm.xlu0 %553, %v550
        %v555 = vpop.permute.xlu0 %554
        %556 = vset.pattern.permute.xlu0 0
        %557 = vperm.xlu0 %556, %v551
        %v558 = vpop.permute.xlu0 %557
        %v559 = vlaneseq
        %v560 = vshrl.u32 %v559, 7
        %v561 = vsub.s32 0, %v560
        %v562 = vrot.slane %v552, %v561
        %vm563 = vcmp.eq.s32.totalorder %v555, %v562
        %vm564 = vcmp.eq.s32.totalorder %v558, %v562
        %v565 = vsub.f32 1.0, %v544
        %v566 = vsub.f32 1.0, %v547
        %v567 = vsub.f32 %v544, 0.5
        %v568 = vsub.f32 %v547, 0.5
        %v569 = vmax.f32 %v567, 0.0
        %v570 = vmax.f32 %v568, 0.0
        %v571 = vsel %vm563, %v565, %v569
        %v572 = vsel %vm564, %v566, %v570
        %v573 = vlaneseq
        %v574 = vshrl.u32 %v573, 7
        %v575 = vadd.s32 %v574, 8
        %s576 = smul.u32 %s36, 16
        %v577 = vstv %s576
        %v578 = vadd.s32 %v574, %v577
        %v579 = vadd.s32 %v575, %v577
        %v580 = vlaneseq
        %v581 = vand.u32 %v580, 127
        %s582 = smul.u32 %s37, 16
        %v583 = vstv %s582
        %v584 = vadd.s32 %v581, %v583
        %vm585 = vcmp.ne.s32.totalorder %v578, %v584
        %vm586 = vcmp.ne.s32.totalorder %v579, %v584
        %v587 = vld [vmem:[%s416] sm:$0xf]
        %v588 = vld [vmem:[%s416 + $0x4] sm:$0xf]
        %v589 = vunpack.c.l.b16 %v587
        %v590 = vunpack.c.l.b16 %v588
        %s591 = sld [smem:[#allocation2]]
        %v592 = vstv %s591
        %vm593 = vcmp.gt.s32.totalorder %v589, %v592
        %vm594 = vcmp.gt.s32.totalorder %v590, %v592
        %vm595 = vmor %vm563, %vm593
        %vm596 = vmor %vm564, %vm594
        %vm597 = vmand %vm595, %vm585
        %vm598 = vmand %vm596, %vm586
        %v599 = vsel %vm597, %v571, 0.0
        %v600 = vsel %vm598, %v572, 0.0
        %vm601 = vcmask 130048
        %v602 = vsel %vm601, %v599, 0.0
        %v603 = vsel %vm601, %v600, 0.0
        %v604 = vadd.f32 %v602, %v603
        %v605 = vrot.slane %v604, 4
        %v606 = vadd.f32 %v604, %v605
        %v607 = vrot.slane %v606, 2
        %v608 = vadd.f32 %v606, %v607
        %v609 = vrot.slane %v608, 1
        %v610 = vadd.f32 %v608, %v609
        %vm611 = vcmask 122880
        %612 = vst.msk [vmem:[%s462] sm:$0x1] %vm611, %v610
        %s613 = sand.u32 %s224, 1
        %s614 = scalar_lea.sflag [#allocation5], %s613
        %s615 = sand.u32 %s224, 1
        %s616 = scalar_lea.vmem [#allocation12], %s615
        // Predicated region
        $region65: #{tpu_custom_call.1} parent=43 // pred_check
          %p617 = pneg %p234
        $region66: #{tpu_custom_call.1} parent=43 // pred_check_branch
          %619 = sbr.rel (%p617) target = $region68
        $region67: #{tpu_custom_call.1} parent=43 // pred_region
          %s621 = ssub.s32 16, 16
          %622 = vsyncadd %s614, %s621
          %s623 = sadd.s32 %s37, %s36
          %s624 = sadd.s32 %s623, %s35
          %s625 = smul.addr %s624, 16
          %s626 = scalar_lea.hbm %s6, %s625
          %s628 = sshll.u32 %s616, 4
          %s629 = int_to_ptr.vmem [resolvable:$true] %s628
          %631 = dma.vmem_to_hbm [thread:$0]  %s629, 16, %s626, %s614
        $region68: #{tpu_custom_call.1} parent=43 // pred_fallthru
          _
      $region44: #{tpu_custom_call.1} parent=5 // pred_fallthru
        _
      %p632 = scmp.le.s32.totalorder 2, %s25
      // Predicated region
      $region69: #{tpu_custom_call.1} parent=5 // pred_check
        %p633 = pneg %p632
      $region70: #{tpu_custom_call.1} parent=5 // pred_check_branch
        %635 = sbr.rel (%p633) target = $region72
      $region71: #{tpu_custom_call.1} parent=5 // pred_region
        %s636 = ssub.s32 %s25, 2
        // Predicated region
        $region73: #{tpu_custom_call.1} parent=71 // pred_check
          %p637 = pneg %p240
        $region74: #{tpu_custom_call.1} parent=71 // pred_check_branch
          %639 = sbr.rel (%p637) target = $region76
        $region75: #{tpu_custom_call.1} parent=71 // pred_region
          %s640 = sand.u32 %s225, 1
          %s641 = scalar_lea.sflag [#allocation5], %s640
          %s642 = sand.u32 %s225, 1
          %s643 = scalar_lea.vmem [#allocation12], %s642
          %644 = dma.done %s641, 16
        $region76: #{tpu_custom_call.1} parent=71 // pred_fallthru
          _
      $region72: #{tpu_custom_call.1} parent=5 // pred_fallthru
        _
    $region6: #{tpu_custom_call.1} parent=1 // loop_footer
      %s29 = sadd.s32 1, %s25
    $region7: #{tpu_custom_call.1} parent=1 // loop_footer_branch
      %24 = sbr.rel target = $region3
    $region8: #{tpu_custom_call.1} parent=1 // loop_exit
      _
    %645 = vsyncpa [#allocation4], 1
    %s646 = scalar_lea.sflag [#allocation4], 1
    %647 = vsyncpa %s646, 1
    %648 = vsyncpa [#allocation7], 1
    %s649 = scalar_lea.sflag [#allocation7], 1
    %650 = vsyncpa %s649, 1
    %651 = vsyncpa [#allocation10], 1
    %s652 = scalar_lea.sflag [#allocation10], 1
    %653 = vsyncpa %s652, 1
    %654 = vsyncpa [#allocation5], 1
    %s655 = scalar_lea.sflag [#allocation5], 1
    %656 = vsyncpa %s655, 1

</llo_original>
